<compile_context>
chip_gen: v5e
topology: v5e:2x2
jax: 0.10.0
libtpu: 0.0.40
codegen_flags: <defaults>
</compile_context>

<pallas_src>
import functools

import jax
import jax.numpy as jnp
from jax.experimental import pallas as pl
from jax.experimental.pallas import tpu as pltpu

LANE = 128
SUBLANE = 8
_MIB = 1 << 20


def _round_up(n, m):
    return ((n + m - 1) // m) * m


def _pad2d(a, rows, cols):
    return jnp.pad(a, ((0, rows - a.shape[0]), (0, cols - a.shape[1])))


# ---------------------------------------------------------------------------
# Kernels
# ---------------------------------------------------------------------------
def resnet_resident_kernel(x_ref, w1_ref, b1_ref, w2_ref, b2_ref, w3_ref,
                           b3_ref, o_ref, *, use_bf16):
    """All three weight matrices VMEM-resident; one batch tile per grid step."""
    # Layer 1 (f32 MXU accumulation, f32 bias add on the VPU).
    h1 = jnp.dot(x_ref[...], w1_ref[...],
                 preferred_element_type=jnp.float32) + b1_ref[...]
    if use_bf16:
        # One bf16 residual reused for the W2 matmul AND the residual add:
        # halves the live [tb, hid] bytes across the second matmul.
        residual = jnp.maximum(h1, 0.0).astype(jnp.bfloat16)
        h2 = jnp.dot(residual, w2_ref[...],
                     preferred_element_type=jnp.float32) + b2_ref[...]
        out = jnp.maximum(h2, 0.0).astype(jnp.bfloat16) + residual
    else:
        residual = jnp.maximum(h1, 0.0)
        h2 = jnp.dot(residual, w2_ref[...],
                     preferred_element_type=jnp.float32) + b2_ref[...]
        out = jnp.maximum(h2, 0.0) + residual
    logits = jnp.dot(out, w3_ref[...],
                     preferred_element_type=jnp.float32) + b3_ref[...]
    o_ref[...] = logits.astype(o_ref.dtype)


def resnet_streamed_kernel(x_ref, w1_ref, b1_ref, w2_ref, b2_ref, w3_ref,
                           b3_ref, o_ref, res_ref, acc_ref, *, n_chunks):
    """K-streamed variant for large hidden sizes.

    Grid = (batch_tiles, hidden_chunks).  Per chunk k:
      residual_k = relu(x @ W1[:, k] + b1[k])           (stored in res scratch)
      acc       += residual_k @ W2[k, :]                 (f32 VMEM accumulator)
    Last chunk: out = relu(acc + b2) + residual; logits = out @ W3 + b3.
    """
    k = pl.program_id(1)
    cdt = w2_ref.dtype

    @pl.when(k == 0)
    def _():
        acc_ref[...] = jnp.zeros_like(acc_ref)

    h1 = jnp.dot(x_ref[...], w1_ref[...],
                 preferred_element_type=jnp.float32) + b1_ref[...]
    res_k = jnp.maximum(h1, 0.0)
    res_ref[k] = res_k.astype(res_ref.dtype)

    acc_ref[...] += jnp.dot(res_k.astype(cdt), w2_ref[...],
                            preferred_element_type=jnp.float32)

    @pl.when(k == n_chunks - 1)
    def _():
        out = jnp.maximum(acc_ref[...] + b2_ref[...], 0.0)
        residual = jnp.concatenate([res_ref[j] for j in range(n_chunks)],
                                   axis=-1)
        out = out + residual.astype(jnp.float32)
        logits = jnp.dot(out.astype(cdt), w3_ref[...],
                         preferred_element_type=jnp.float32) + b3_ref[...]
        o_ref[...] = logits.astype(o_ref.dtype)


# ---------------------------------------------------------------------------
# Parameter prep (one-time, outside the per-step forward)
# ---------------------------------------------------------------------------
def prepare_params(w1, b1, w2, b2, w3, b3, compute_dtype=jnp.float32):
    """Pad feature dims to 128-multiples, transpose weights to [in, out],
    reshape biases to [1, out], cast weights to the compute dtype."""
    hidden, input_size = w1.shape
    num_classes = w3.shape[0]
    in_p = _round_up(input_size, LANE)
    hid_p = _round_up(hidden, LANE)
    out_p = _round_up(num_classes, LANE)
    params = dict(
        w1=_pad2d(w1.T, in_p, hid_p).astype(compute_dtype),
        b1=_pad2d(b1.reshape(1, -1), 1, hid_p).astype(jnp.float32),
        w2=_pad2d(w2.T, hid_p, hid_p).astype(compute_dtype),
        b2=_pad2d(b2.reshape(1, -1), 1, hid_p).astype(jnp.float32),
        w3=_pad2d(w3.T, hid_p, out_p).astype(compute_dtype),
        b3=_pad2d(b3.reshape(1, -1), 1, out_p).astype(jnp.float32),
    )
    meta = dict(input_size=input_size, num_classes=num_classes,
                in_p=in_p, hid_p=hid_p, out_p=out_p,
                compute_dtype=compute_dtype)
    return params, meta


# ---------------------------------------------------------------------------
# Wrapper helpers
# ---------------------------------------------------------------------------
def _vmem_limit(est_bytes):
    # Estimate + 30% headroom + internal scratch; at least 32 MiB (defaults are
    # only 16 MiB on v5e / 32 MiB on v6e+), capped at 64 MiB (v7x per-core).
    return int(min(max(int(est_bytes * 1.3) + 4 * _MIB, 32 * _MIB), 64 * _MIB))


def _resident_vmem_budget():
    # Conservative per-TensorCore budget: v7x has 64 MiB/TC and the "parallel"
    # batch axis gives each core its own copy of the resident weights.  Keep
    # half for pipeline buffers, live activations and Mosaic internal scratch.
    try:
        cap = int(pltpu.get_tpu_info().vmem_capacity_bytes)
    except Exception:
        cap = 64 * _MIB
    return min(cap, 64 * _MIB) // 2


def _choose_batch_tile(B, batch_tile):
    tb = max(SUBLANE, min(_round_up(batch_tile, SUBLANE), _round_up(B, SUBLANE)))
    # Guarantee >= 2 grid steps so v7x's two TensorCores both get work.
    if _round_up(B, tb) // tb < 2 and B > SUBLANE:
        tb = _round_up((B + 1) // 2, SUBLANE)
    # Avoid pathological last-tile padding (> ~25% of B zero rows).
    while tb > SUBLANE and (_round_up(B, tb) - B) * 4 > B:
        tb -= SUBLANE
    return tb


def _resident_spec(arr, index_map, single_buffer):
    # Weights/biases keep the same block index for every grid step, so a
    # single VMEM buffer is enough; double-buffering them is pure VMEM waste.
    if single_buffer:
        return pl.BlockSpec(arr.shape, index_map, pipeline_mode=pl.Buffered(1))
    return pl.BlockSpec(arr.shape, index_map)


def _call_with_fallback(build, args):
    try:
        return build(True)(*args)
    except Exception:
        # TODO(synk): drop this fallback once pipeline_mode=pl.Buffered(1) is
        # universally supported; its only cost is 2x VMEM for resident weights.
        return build(False)(*args)


# ---------------------------------------------------------------------------
# Forward paths
# ---------------------------------------------------------------------------
def _forward_resident(x_p, params, meta, tb, n_tiles, b_pad):
    in_p, hid_p, out_p = meta["in_p"], meta["hid_p"], meta["out_p"]
    wbytes = params["w1"].dtype.itemsize
    use_bf16 = params["w1"].dtype == jnp.bfloat16
    weight_elems = in_p * hid_p + hid_p * hid_p + hid_p * out_p

    cost = pl.CostEstimate(
        flops=2 * b_pad * weight_elems,
        transcendentals=0,
        bytes_accessed=int(weight_elems * wbytes + b_pad * in_p * wbytes
                           + b_pad * out_p * 4))
    kernel = functools.partial(resnet_resident_kernel, use_bf16=use_bf16)

    def build(single_buffer):
        wmul = 1 if single_buffer else 2
        est = (wmul * weight_elems * wbytes
               + 2 * tb * in_p * wbytes + 2 * tb * out_p * 4
               + wmul * SUBLANE * 4 * (2 * hid_p + out_p))
        res = lambda a: _resident_spec(a, lambda i: (0, 0), single_buffer)
        return pl.pallas_call(
            kernel,
            out_shape=jax.ShapeDtypeStruct((b_pad, out_p), jnp.float32),
            grid=(n_tiles,),
            in_specs=[pl.BlockSpec((tb, in_p), lambda i: (i, 0)),   # x tile
                      res(params["w1"]), res(params["b1"]),
                      res(params["w2"]), res(params["b2"]),
                      res(params["w3"]), res(params["b3"])],
            out_specs=pl.BlockSpec((tb, out_p), lambda i: (i, 0)),
            compiler_params=pltpu.CompilerParams(
                dimension_semantics=("parallel",),
                vmem_limit_bytes=_vmem_limit(est)),
            cost_estimate=cost,
        )

    return _call_with_fallback(
        build, (x_p, params["w1"], params["b1"], params["w2"], params["b2"],
                params["w3"], params["b3"]))


def _forward_streamed(x_p, params, meta, tb, n_tiles, b_pad, budget,
                      stream_chunk=None):
    in_p, hid_p, out_p = meta["in_p"], meta["hid_p"], meta["out_p"]
    wbytes = params["w1"].dtype.itemsize
    weight_elems = in_p * hid_p + hid_p * hid_p + hid_p * out_p

    def step_bytes(th):
        return (2 * tb * in_p * wbytes               # x tile (double-buffered)
                + 2 * (in_p + hid_p) * th * wbytes   # streamed W1 / W2 chunks
                + hid_p * out_p * wbytes             # resident W3
                + 2 * tb * out_p * 4                 # out tile
                + tb * hid_p * (wbytes + 4)          # residual + f32 accumulator
                + SUBLANE * 4 * (2 * hid_p + out_p + th))  # biases

    if stream_chunk is not None:
        th = int(stream_chunk)
    else:
        th = LANE  # smallest legal chunk; enlarged below if it fits the budget
        for n in range(1, hid_p // LANE + 1):
            if hid_p % n:
                continue
            cand = hid_p // n
            if cand % LANE == 0 and step_bytes(cand) <= budget:
                th = cand
                break
    assert hid_p % th == 0 and th % LANE == 0
    n_chunks = hid_p // th

    cost = pl.CostEstimate(
        flops=2 * b_pad * weight_elems,
        transcendentals=0,
        bytes_accessed=int(n_tiles * (in_p + hid_p) * hid_p * wbytes
                           + hid_p * out_p * wbytes
                           + b_pad * in_p * wbytes + b_pad * out_p * 4))
    kernel = functools.partial(resnet_streamed_kernel, n_chunks=n_chunks)

    def build(single_buffer):
        res = lambda a: _resident_spec(a, lambda i, k: (0, 0), single_buffer)
        return pl.pallas_call(
            kernel,
            out_shape=jax.ShapeDtypeStruct((b_pad, out_p), jnp.float32),
            grid=(n_tiles, n_chunks),
            in_specs=[
                pl.BlockSpec((tb, in_p), lambda i, k: (i, 0)),    # x (resident over k)
                pl.BlockSpec((in_p, th), lambda i, k: (0, k)),    # W1 column chunk
                pl.BlockSpec((1, th), lambda i, k: (0, k)),       # b1 chunk
                pl.BlockSpec((th, hid_p), lambda i, k: (k, 0)),   # W2 row chunk
                res(params["b2"]), res(params["w3"]), res(params["b3"]),
            ],
            out_specs=pl.BlockSpec((tb, out_p), lambda i, k: (i, 0)),
            scratch_shapes=[
                pltpu.VMEM((n_chunks, tb, th), params["w1"].dtype),  # residual
                pltpu.VMEM((tb, hid_p), jnp.float32),                # layer-2 acc
            ],
            compiler_params=pltpu.CompilerParams(
                dimension_semantics=("parallel", "arbitrary"),
                vmem_limit_bytes=_vmem_limit(step_bytes(th))),
            cost_estimate=cost,
        )

    return _call_with_fallback(
        build, (x_p, params["w1"], params["b1"], params["w2"], params["b2"],
                params["w3"], params["b3"]))


def resnet_forward(x, params, meta, batch_tile=512, force_stream=False,
                   stream_chunk=None):
    """x: [B, input_size] float32 -> [B, num_classes] float32."""
    B = x.shape[0]
    in_p, hid_p, out_p = meta["in_p"], meta["hid_p"], meta["out_p"]
    cdt = meta["compute_dtype"]
    wbytes = params["w1"].dtype.itemsize

    tb = _choose_batch_tile(B, batch_tile)
    b_pad = _round_up(B, tb)
    n_tiles = b_pad // tb
    x_p = jnp.pad(x, ((0, b_pad - B), (0, in_p - x.shape[1]))).astype(cdt)

    budget = _resident_vmem_budget()
    resident_est = ((in_p * hid_p + hid_p * hid_p + hid_p * out_p) * wbytes
                    + 2 * tb * in_p * wbytes + 2 * tb * out_p * 4
                    + SUBLANE * 4 * (2 * hid_p + out_p))

    if force_stream or resident_est > budget:
        out = _forward_streamed(x_p, params, meta, tb, n_tiles, b_pad, budget,
                                stream_chunk)
    else:
        out = _forward_resident(x_p, params, meta, tb, n_tiles, b_pad)
    return out[:B, :meta["num_classes"]]


def _ref_forward(x, w1, b1, w2, b2, w3, b3):
    residual = jnp.maximum(x @ w1.T + b1, 0.0)
    out = jnp.maximum(residual @ w2.T + b2, 0.0)
    out = out + residual
    return out @ w3.T + b3


if __name__ == "__main__":
    def lin_init(kw, kb, fan_in, fan_out):
        bound = 1.0 / (fan_in ** 0.5)
        w = jax.random.uniform(kw, (fan_out, fan_in), jnp.float32, -bound, bound)
        b = jax.random.uniform(kb, (fan_out,), jnp.float32, -bound, bound)
        return w, b

    # --- Small config (resident-weight path), f32 strict + bf16 loose checks.
    key = jax.random.PRNGKey(0)
    batch, input_size, hidden_size, num_classes = 8, 16, 32, 10
    ks = jax.random.split(key, 7)
    x = jax.random.normal(ks[0], (batch, input_size), dtype=jnp.float32)
    w1, b1 = lin_init(ks[1], ks[2], input_size, hidden_size)
    w2, b2 = lin_init(ks[3], ks[4], hidden_size, hidden_size)
    w3, b3 = lin_init(ks[5], ks[6], hidden_size, num_classes)
    ref = _ref_forward(x, w1, b1, w2, b2, w3, b3)

    params_f32, meta_f32 = prepare_params(w1, b1, w2, b2, w3, b3, jnp.float32)
    out_f32 = jax.block_until_ready(resnet_forward(x, params_f32, meta_f32))
    assert out_f32.shape == (batch, num_classes)
    assert jnp.allclose(out_f32, ref, atol=1e-4, rtol=1e-4)

    params_bf16, meta_bf16 = prepare_params(w1, b1, w2, b2, w3, b3, jnp.bfloat16)
    out_bf16 = jax.block_until_ready(resnet_forward(x, params_bf16, meta_bf16))
    assert out_bf16.shape == (batch, num_classes)
    assert jnp.allclose(out_bf16, ref, atol=3e-2, rtol=3e-2)

    # --- Force the K-streamed path (2 hidden chunks x 2 batch tiles) so the
    #     large-hidden fallback is exercised and verified too (f32, strict).
    batch2, in2, hid2, nc2 = 96, 64, 256, 10
    ks2 = jax.random.split(jax.random.PRNGKey(1), 7)
    x2 = jax.random.normal(ks2[0], (batch2, in2), dtype=jnp.float32)
    w1b, b1b = lin_init(ks2[1], ks2[2], in2, hid2)
    w2b, b2b = lin_init(ks2[3], ks2[4], hid2, hid2)
    w3b, b3b = lin_init(ks2[5], ks2[6], hid2, nc2)
    ref2 = _ref_forward(x2, w1b, b1b, w2b, b2b, w3b, b3b)

    params2, meta2 = prepare_params(w1b, b1b, w2b, b2b, w3b, b3b, jnp.float32)
    out2 = jax.block_until_ready(
        resnet_forward(x2, params2, meta2, force_stream=True, stream_chunk=128))
    assert out2.shape == (batch2, nc2)
    assert jnp.allclose(out2, ref2, atol=1e-4, rtol=1e-4)

    print("KERNEL_OK")
</pallas_src>

<mosaic_0001>
module attributes {stable_mosaic.version = 11 : i64} {
  func.func @resnet_resident_kernel(%arg0: i32, %arg1: memref<8x128xf32, #tpu.memory_space<vmem>>, %arg2: memref<128x128xf32, #tpu.memory_space<vmem>>, %arg3: memref<1x128xf32, #tpu.memory_space<vmem>>, %arg4: memref<128x128xf32, #tpu.memory_space<vmem>>, %arg5: memref<1x128xf32, #tpu.memory_space<vmem>>, %arg6: memref<128x128xf32, #tpu.memory_space<vmem>>, %arg7: memref<1x128xf32, #tpu.memory_space<vmem>>, %arg8: memref<8x128xf32, #tpu.memory_space<vmem>>) attributes {dimension_semantics = [#tpu.dimension_semantics<parallel>], iteration_bounds = array<i64: 1>, scalar_prefetch = 0 : i64, scratch_operands = 0 : i64, tpu.core_type = #tpu.core_type<tc>, window_params = [{transform_indices = @transform_0, window_bounds = array<i64: 8, 128>}, {pipeline_mode = #tpu.pipeline_mode<synchronous>, transform_indices = @transform_1, window_bounds = array<i64: 128, 128>}, {pipeline_mode = #tpu.pipeline_mode<synchronous>, transform_indices = @transform_2, window_bounds = array<i64: 1, 128>}, {pipeline_mode = #tpu.pipeline_mode<synchronous>, transform_indices = @transform_3, window_bounds = array<i64: 128, 128>}, {pipeline_mode = #tpu.pipeline_mode<synchronous>, transform_indices = @transform_4, window_bounds = array<i64: 1, 128>}, {pipeline_mode = #tpu.pipeline_mode<synchronous>, transform_indices = @transform_5, window_bounds = array<i64: 128, 128>}, {pipeline_mode = #tpu.pipeline_mode<synchronous>, transform_indices = @transform_6, window_bounds = array<i64: 1, 128>}, {transform_indices = @transform_7, window_bounds = array<i64: 8, 128>}]} {
    %c0 = arith.constant 0 : index
    %c0_0 = arith.constant 0 : index
    %0 = vector.load %arg1[%c0, %c0_0] : memref<8x128xf32, #tpu.memory_space<vmem>>, vector<8x128xf32>
    %c0_1 = arith.constant 0 : index
    %c0_2 = arith.constant 0 : index
    %1 = vector.load %arg2[%c0_1, %c0_2] : memref<128x128xf32, #tpu.memory_space<vmem>>, vector<128x128xf32>
    %cst = arith.constant dense<0.000000e+00> : vector<8x128xf32>
    %2 = tpu.matmul %0, %1, %cst {dimension_numbers = #tpu.dot_dimension_numbers<[1], [0], [0], [1], [0, 0, 1, 1], [], []>} : vector<8x128xf32>, vector<128x128xf32>, vector<8x128xf32> -> vector<8x128xf32>
    %c0_3 = arith.constant 0 : index
    %c0_4 = arith.constant 0 : index
    %3 = vector.load %arg3[%c0_3, %c0_4] : memref<1x128xf32, #tpu.memory_space<vmem>>, vector<1x128xf32>
    %4 = vector.broadcast %3 : vector<1x128xf32> to vector<8x128xf32>
    %5 = arith.addf %2, %4 : vector<8x128xf32>
    %cst_5 = arith.constant 0.000000e+00 : f32
    %6 = vector.broadcast %cst_5 : f32 to vector<8x128xf32>
    %7 = arith.maximumf %5, %6 : vector<8x128xf32>
    %c0_6 = arith.constant 0 : index
    %c0_7 = arith.constant 0 : index
    %8 = vector.load %arg4[%c0_6, %c0_7] : memref<128x128xf32, #tpu.memory_space<vmem>>, vector<128x128xf32>
    %cst_8 = arith.constant dense<0.000000e+00> : vector<8x128xf32>
    %9 = tpu.matmul %7, %8, %cst_8 {dimension_numbers = #tpu.dot_dimension_numbers<[1], [0], [0], [1], [0, 0, 1, 1], [], []>} : vector<8x128xf32>, vector<128x128xf32>, vector<8x128xf32> -> vector<8x128xf32>
    %c0_9 = arith.constant 0 : index
    %c0_10 = arith.constant 0 : index
    %10 = vector.load %arg5[%c0_9, %c0_10] : memref<1x128xf32, #tpu.memory_space<vmem>>, vector<1x128xf32>
    %11 = vector.broadcast %10 : vector<1x128xf32> to vector<8x128xf32>
    %12 = arith.addf %9, %11 : vector<8x128xf32>
    %cst_11 = arith.constant 0.000000e+00 : f32
    %13 = vector.broadcast %cst_11 : f32 to vector<8x128xf32>
    %14 = arith.maximumf %12, %13 : vector<8x128xf32>
    %15 = arith.addf %14, %7 : vector<8x128xf32>
    %c0_12 = arith.constant 0 : index
    %c0_13 = arith.constant 0 : index
    %16 = vector.load %arg6[%c0_12, %c0_13] : memref<128x128xf32, #tpu.memory_space<vmem>>, vector<128x128xf32>
    %cst_14 = arith.constant dense<0.000000e+00> : vector<8x128xf32>
    %17 = tpu.matmul %15, %16, %cst_14 {dimension_numbers = #tpu.dot_dimension_numbers<[1], [0], [0], [1], [0, 0, 1, 1], [], []>} : vector<8x128xf32>, vector<128x128xf32>, vector<8x128xf32> -> vector<8x128xf32>
    %c0_15 = arith.constant 0 : index
    %c0_16 = arith.constant 0 : index
    %18 = vector.load %arg7[%c0_15, %c0_16] : memref<1x128xf32, #tpu.memory_space<vmem>>, vector<1x128xf32>
    %19 = vector.broadcast %18 : vector<1x128xf32> to vector<8x128xf32>
    %20 = arith.addf %17, %19 : vector<8x128xf32>
    %c0_17 = arith.constant 0 : index
    %c0_18 = arith.constant 0 : index
    %21 = vector.load %arg8[%c0_17, %c0_18] : memref<8x128xf32, #tpu.memory_space<vmem>>, vector<8x128xf32>
    tpu.vector_store %arg8[%c0_17, %c0_18], %20 {strides = array<i32>} : memref<8x128xf32, #tpu.memory_space<vmem>>, vector<8x128xf32>,
    return
  }
  func.func @transform_0(%arg0: i32) -> (i32, i32) {
    %c0_i32 = arith.constant 0 : i32
    %c0_i32_0 = arith.constant 0 : i32
    return %arg0, %c0_i32 : i32, i32
  }
  func.func @transform_1(%arg0: i32) -> (i32, i32) {
    %c0_i32 = arith.constant 0 : i32
    %c0_i32_0 = arith.constant 0 : i32
    %c0_i32_1 = arith.constant 0 : i32
    return %c0_i32, %c0_i32_0 : i32, i32
  }
  func.func @transform_2(%arg0: i32) -> (i32, i32) {
    %c0_i32 = arith.constant 0 : i32
    %c0_i32_0 = arith.constant 0 : i32
    %c0_i32_1 = arith.constant 0 : i32
    return %c0_i32, %c0_i32_0 : i32, i32
  }
  func.func @transform_3(%arg0: i32) -> (i32, i32) {
    %c0_i32 = arith.constant 0 : i32
    %c0_i32_0 = arith.constant 0 : i32
    %c0_i32_1 = arith.constant 0 : i32
    return %c0_i32, %c0_i32_0 : i32, i32
  }
  func.func @transform_4(%arg0: i32) -> (i32, i32) {
    %c0_i32 = arith.constant 0 : i32
    %c0_i32_0 = arith.constant 0 : i32
    %c0_i32_1 = arith.constant 0 : i32
    return %c0_i32, %c0_i32_0 : i32, i32
  }
  func.func @transform_5(%arg0: i32) -> (i32, i32) {
    %c0_i32 = arith.constant 0 : i32
    %c0_i32_0 = arith.constant 0 : i32
    %c0_i32_1 = arith.constant 0 : i32
    return %c0_i32, %c0_i32_0 : i32, i32
  }
  func.func @transform_6(%arg0: i32) -> (i32, i32) {
    %c0_i32 = arith.constant 0 : i32
    %c0_i32_0 = arith.constant 0 : i32
    %c0_i32_1 = arith.constant 0 : i32
    return %c0_i32, %c0_i32_0 : i32, i32
  }
  func.func @transform_7(%arg0: i32) -> (i32, i32) {
    %c0_i32 = arith.constant 0 : i32
    %c0_i32_0 = arith.constant 0 : i32
    return %arg0, %c0_i32 : i32, i32
  }
}

module attributes {stable_mosaic.version = 11 : i64} {
  func.func @resnet_resident_kernel(%arg0: i32, %arg1: memref<8x128xf32, #tpu.memory_space<vmem>>, %arg2: memref<128x128xf32, #tpu.memory_space<vmem>>, %arg3: memref<1x128xf32, #tpu.memory_space<vmem>>, %arg4: memref<128x128xf32, #tpu.memory_space<vmem>>, %arg5: memref<1x128xf32, #tpu.memory_space<vmem>>, %arg6: memref<128x128xf32, #tpu.memory_space<vmem>>, %arg7: memref<1x128xf32, #tpu.memory_space<vmem>>, %arg8: memref<8x128xf32, #tpu.memory_space<vmem>>) attributes {dimension_semantics = [#tpu.dimension_semantics<parallel>], iteration_bounds = array<i64: 1>, scalar_prefetch = 0 : i64, scratch_operands = 0 : i64, tpu.core_type = #tpu.core_type<tc>, window_params = [{transform_indices = @transform_0, window_bounds = array<i64: 8, 128>}, {pipeline_mode = #tpu.pipeline_mode<synchronous>, transform_indices = @transform_1, window_bounds = array<i64: 128, 128>}, {pipeline_mode = #tpu.pipeline_mode<synchronous>, transform_indices = @transform_2, window_bounds = array<i64: 1, 128>}, {pipeline_mode = #tpu.pipeline_mode<synchronous>, transform_indices = @transform_3, window_bounds = array<i64: 128, 128>}, {pipeline_mode = #tpu.pipeline_mode<synchronous>, transform_indices = @transform_4, window_bounds = array<i64: 1, 128>}, {pipeline_mode = #tpu.pipeline_mode<synchronous>, transform_indices = @transform_5, window_bounds = array<i64: 128, 128>}, {pipeline_mode = #tpu.pipeline_mode<synchronous>, transform_indices = @transform_6, window_bounds = array<i64: 1, 128>}, {transform_indices = @transform_7, window_bounds = array<i64: 8, 128>}]} {
    %c0 = arith.constant 0 : index
    %c0_0 = arith.constant 0 : index
    %0 = vector.load %arg1[%c0, %c0_0] : memref<8x128xf32, #tpu.memory_space<vmem>>, vector<8x128xf32>
    %c0_1 = arith.constant 0 : index
    %c0_2 = arith.constant 0 : index
    %1 = vector.load %arg2[%c0_1, %c0_2] : memref<128x128xf32, #tpu.memory_space<vmem>>, vector<128x128xf32>
    %cst = arith.constant dense<0.000000e+00> : vector<8x128xf32>
    %2 = tpu.matmul %0, %1, %cst {dimension_numbers = #tpu.dot_dimension_numbers<[1], [0], [0], [1], [0, 0, 1, 1], [], []>} : vector<8x128xf32>, vector<128x128xf32>, vector<8x128xf32> -> vector<8x128xf32>
    %c0_3 = arith.constant 0 : index
    %c0_4 = arith.constant 0 : index
    %3 = vector.load %arg3[%c0_3, %c0_4] : memref<1x128xf32, #tpu.memory_space<vmem>>, vector<1x128xf32>
    %4 = vector.broadcast %3 : vector<1x128xf32> to vector<8x128xf32>
    %5 = arith.addf %2, %4 : vector<8x128xf32>
    %cst_5 = arith.constant 0.000000e+00 : f32
    %6 = vector.broadcast %cst_5 : f32 to vector<8x128xf32>
    %7 = arith.maximumf %5, %6 : vector<8x128xf32>
    %c0_6 = arith.constant 0 : index
    %c0_7 = arith.constant 0 : index
    %8 = vector.load %arg4[%c0_6, %c0_7] : memref<128x128xf32, #tpu.memory_space<vmem>>, vector<128x128xf32>
    %cst_8 = arith.constant dense<0.000000e+00> : vector<8x128xf32>
    %9 = tpu.matmul %7, %8, %cst_8 {dimension_numbers = #tpu.dot_dimension_numbers<[1], [0], [0], [1], [0, 0, 1, 1], [], []>} : vector<8x128xf32>, vector<128x128xf32>, vector<8x128xf32> -> vector<8x128xf32>
    %c0_9 = arith.constant 0 : index
    %c0_10 = arith.constant 0 : index
    %10 = vector.load %arg5[%c0_9, %c0_10] : memref<1x128xf32, #tpu.memory_space<vmem>>, vector<1x128xf32>
    %11 = vector.broadcast %10 : vector<1x128xf32> to vector<8x128xf32>
    %12 = arith.addf %9, %11 : vector<8x128xf32>
    %cst_11 = arith.constant 0.000000e+00 : f32
    %13 = vector.broadcast %cst_11 : f32 to vector<8x128xf32>
    %14 = arith.maximumf %12, %13 : vector<8x128xf32>
    %15 = arith.addf %14, %7 : vector<8x128xf32>
    %c0_12 = arith.constant 0 : index
    %c0_13 = arith.constant 0 : index
    %16 = vector.load %arg6[%c0_12, %c0_13] : memref<128x128xf32, #tpu.memory_space<vmem>>, vector<128x128xf32>
    %cst_14 = arith.constant dense<0.000000e+00> : vector<8x128xf32>
    %17 = tpu.matmul %15, %16, %cst_14 {dimension_numbers = #tpu.dot_dimension_numbers<[1], [0], [0], [1], [0, 0, 1, 1], [], []>} : vector<8x128xf32>, vector<128x128xf32>, vector<8x128xf32> -> vector<8x128xf32>
    %c0_15 = arith.constant 0 : index
    %c0_16 = arith.constant 0 : index
    %18 = vector.load %arg7[%c0_15, %c0_16] : memref<1x128xf32, #tpu.memory_space<vmem>>, vector<1x128xf32>
    %19 = vector.broadcast %18 : vector<1x128xf32> to vector<8x128xf32>
    %20 = arith.addf %17, %19 : vector<8x128xf32>
    %c0_17 = arith.constant 0 : index
    %c0_18 = arith.constant 0 : index
    %21 = vector.load %arg8[%c0_17, %c0_18] : memref<8x128xf32, #tpu.memory_space<vmem>>, vector<8x128xf32>
    tpu.vector_store %arg8[%c0_17, %c0_18], %20 {strides = array<i32>} : memref<8x128xf32, #tpu.memory_space<vmem>>, vector<8x128xf32>,
    return
  }
  func.func @transform_0(%arg0: i32) -> (i32, i32) {
    %c0_i32 = arith.constant 0 : i32
    %c0_i32_0 = arith.constant 0 : i32
    return %arg0, %c0_i32 : i32, i32
  }
  func.func @transform_1(%arg0: i32) -> (i32, i32) {
    %c0_i32 = arith.constant 0 : i32
    %c0_i32_0 = arith.constant 0 : i32
    %c0_i32_1 = arith.constant 0 : i32
    return %c0_i32, %c0_i32_0 : i32, i32
  }
  func.func @transform_2(%arg0: i32) -> (i32, i32) {
    %c0_i32 = arith.constant 0 : i32
    %c0_i32_0 = arith.constant 0 : i32
    %c0_i32_1 = arith.constant 0 : i32
    return %c0_i32, %c0_i32_0 : i32, i32
  }
  func.func @transform_3(%arg0: i32) -> (i32, i32) {
    %c0_i32 = arith.constant 0 : i32
    %c0_i32_0 = arith.constant 0 : i32
    %c0_i32_1 = arith.constant 0 : i32
    return %c0_i32, %c0_i32_0 : i32, i32
  }
  func.func @transform_4(%arg0: i32) -> (i32, i32) {
    %c0_i32 = arith.constant 0 : i32
    %c0_i32_0 = arith.constant 0 : i32
    %c0_i32_1 = arith.constant 0 : i32
    return %c0_i32, %c0_i32_0 : i32, i32
  }
  func.func @transform_5(%arg0: i32) -> (i32, i32) {
    %c0_i32 = arith.constant 0 : i32
    %c0_i32_0 = arith.constant 0 : i32
    %c0_i32_1 = arith.constant 0 : i32
    return %c0_i32, %c0_i32_0 : i32, i32
  }
  func.func @transform_6(%arg0: i32) -> (i32, i32) {
    %c0_i32 = arith.constant 0 : i32
    %c0_i32_0 = arith.constant 0 : i32
    %c0_i32_1 = arith.constant 0 : i32
    return %c0_i32, %c0_i32_0 : i32, i32
  }
  func.func @transform_7(%arg0: i32) -> (i32, i32) {
    %c0_i32 = arith.constant 0 : i32
    %c0_i32_0 = arith.constant 0 : i32
    return %arg0, %c0_i32 : i32, i32
  }
}

</mosaic_0001>

<llo_original>
// kernel: tpu_custom_call.1
$region0: #{tpu_custom_call.1}
  #allocation0 [shape = 'u32[]', space=smem, size = 0x4, offset = 0x4, fixed_abs, tag = 'smem constant byte address 0x4 - core index']
  #allocation1 [shape = 'u32[72,128]{1,0:T(1,128)}', space=vmem, size = 0x9000, scoped, tag = 'internal scratch']
  %s0 = inlined_call_operand.hbm [shape: f32[8,128], index: 0, kind: input, shape index: {}]
  %s1 = inlined_call_operand.hbm [shape: f32[128,128], index: 1, kind: input, shape index: {}]
  %s2 = inlined_call_operand.vmem [shape: f32[1,128], index: 2, kind: input, shape index: {}]
  %s3 = inlined_call_operand.hbm [shape: f32[128,128], index: 3, kind: input, shape index: {}]
  %s4 = inlined_call_operand.vmem [shape: f32[1,128], index: 4, kind: input, shape index: {}]
  %s5 = inlined_call_operand.hbm [shape: f32[128,128], index: 5, kind: input, shape index: {}]
  %s6 = inlined_call_operand.vmem [shape: f32[1,128], index: 6, kind: input, shape index: {}]
  %s7 = inlined_call_operand.hbm [shape: f32[8,128], index: 7, kind: output, shape index: {}]
  %s8 = sld [smem:[#allocation0]]
  $region54: #{tpu_custom_call.1} parent=0
    _
  %s10 = ssub.s32 1, %s8
  %s11 = scalar_select 0, %s10, %s8
  $region1: #{tpu_custom_call.1} parent=0
    #allocation2 [shape = 'u8[4096]{0}', space=vmem, size = 0x1000, scoped, tag = 'input window, operand 0, single buffered']
    #allocation3 [shape = 's32[1]{0}', space=sflag, size = 0x4, scoped, tag = 'scoped memory for tpu_custom_call.1']
    #allocation4 [shape = 's32[1]{0}', space=sflag, size = 0x4, scoped, tag = 'scoped memory for tpu_custom_call.1']
    #allocation5 [shape = 'u8[65536]{0}', space=vmem, size = 0x10000, scoped, tag = 'input window, operand 1, single buffered']
    #allocation6 [shape = 's32[1]{0}', space=sflag, size = 0x4, scoped, tag = 'scoped memory for tpu_custom_call.1']
    #allocation7 [shape = 'u8[65536]{0}', space=vmem, size = 0x10000, scoped, tag = 'input window, operand 3, single buffered']
    #allocation8 [shape = 'u8[65536]{0}', space=vmem, size = 0x10000, scoped, tag = 'input window, operand 5, single buffered']
    #allocation9 [shape = 's32[1]{0}', space=sflag, size = 0x4, scoped, tag = 'scoped memory for tpu_custom_call.1']
    #allocation10 [shape = 'u8[4096]{0}', space=vmem, size = 0x1000, scoped, tag = 'output window, operand 0, single buffered']
    %12 = vsyncpa [#allocation3], 0
    %13 = vsyncpa [#allocation6], 0
    %14 = vsyncpa [#allocation9], 0
    %15 = vsyncpa [#allocation4], 0
    // Predicated region
    $region2: #{tpu_custom_call.1} parent=1 // pred_check
      _
    $region3: #{tpu_custom_call.1} parent=1 // pred_check_branch
      %17 = sbr.rel (0) target = $region5
    $region4: #{tpu_custom_call.1} parent=1 // pred_region
      %19 = vsyncadd [#allocation3], 0
      %s21 = sshll.u32 %s0, 4
      %s22 = int_to_ptr.hbm [resolvable:$true] %s21
      %s23 = sshll.u32 [#allocation2], 4
      %s24 = int_to_ptr.vmem [resolvable:$true] %s23
      %26 = dma.hbm_to_vmem [thread:$0]  %s22, 128, %s24, [#allocation3]
    $region5: #{tpu_custom_call.1} parent=1 // pred_fallthru
      _
    // Predicated region
    $region6: #{tpu_custom_call.1} parent=1 // pred_check
      _
    $region7: #{tpu_custom_call.1} parent=1 // pred_check_branch
      %28 = sbr.rel (0) target = $region9
    $region8: #{tpu_custom_call.1} parent=1 // pred_region
      %30 = vsyncadd [#allocation6], 0
      %s31 = sshll.u32 %s1, 4
      %s32 = int_to_ptr.hbm [resolvable:$true] %s31
      %s33 = sshll.u32 [#allocation5], 4
      %s34 = int_to_ptr.vmem [resolvable:$true] %s33
      %39 = dma.hbm_to_vmem [thread:$0]  %s32, 2048, %s34, [#allocation6], 128, 128, 8
    $region9: #{tpu_custom_call.1} parent=1 // pred_fallthru
      _
    // Predicated region
    $region10: #{tpu_custom_call.1} parent=1 // pred_check
      _
    $region11: #{tpu_custom_call.1} parent=1 // pred_check_branch
      %41 = sbr.rel (0) target = $region13
    $region12: #{tpu_custom_call.1} parent=1 // pred_region
      _
    $region13: #{tpu_custom_call.1} parent=1 // pred_fallthru
      _
    // Predicated region
    $region14: #{tpu_custom_call.1} parent=1 // pred_check
      _
    $region15: #{tpu_custom_call.1} parent=1 // pred_check_branch
      %43 = sbr.rel (0) target = $region17
    $region16: #{tpu_custom_call.1} parent=1 // pred_region
      %45 = vsyncadd [#allocation6], 0
      %s46 = sshll.u32 %s3, 4
      %s47 = int_to_ptr.hbm [resolvable:$true] %s46
      %s48 = sshll.u32 [#allocation7], 4
      %s49 = int_to_ptr.vmem [resolvable:$true] %s48
      %54 = dma.hbm_to_vmem [thread:$0]  %s47, 2048, %s49, [#allocation6], 128, 128, 8
    $region17: #{tpu_custom_call.1} parent=1 // pred_fallthru
      _
    // Predicated region
    $region18: #{tpu_custom_call.1} parent=1 // pred_check
      _
    $region19: #{tpu_custom_call.1} parent=1 // pred_check_branch
      %56 = sbr.rel (0) target = $region21
    $region20: #{tpu_custom_call.1} parent=1 // pred_region
      _
    $region21: #{tpu_custom_call.1} parent=1 // pred_fallthru
      _
    // Predicated region
    $region22: #{tpu_custom_call.1} parent=1 // pred_check
      _
    $region23: #{tpu_custom_call.1} parent=1 // pred_check_branch
      %58 = sbr.rel (0) target = $region25
    $region24: #{tpu_custom_call.1} parent=1 // pred_region
      %60 = vsyncadd [#allocation9], 0
      %s61 = sshll.u32 %s5, 4
      %s62 = int_to_ptr.hbm [resolvable:$true] %s61
      %s63 = sshll.u32 [#allocation8], 4
      %s64 = int_to_ptr.vmem [resolvable:$true] %s63
      %69 = dma.hbm_to_vmem [thread:$0]  %s62, 2048, %s64, [#allocation9], 128, 128, 8
    $region25: #{tpu_custom_call.1} parent=1 // pred_fallthru
      _
    // Predicated region
    $region26: #{tpu_custom_call.1} parent=1 // pred_check
      _
    $region27: #{tpu_custom_call.1} parent=1 // pred_check_branch
      %71 = sbr.rel (0) target = $region29
    $region28: #{tpu_custom_call.1} parent=1 // pred_region
      _
    $region29: #{tpu_custom_call.1} parent=1 // pred_fallthru
      _
    // Predicated region
    $region30: #{tpu_custom_call.1} parent=1 // pred_check
      _
    $region31: #{tpu_custom_call.1} parent=1 // pred_check_branch
      %73 = sbr.rel (0) target = $region33
    $region32: #{tpu_custom_call.1} parent=1 // pred_region
      %75 = dma.done [#allocation3], 128
    $region33: #{tpu_custom_call.1} parent=1 // pred_fallthru
      _
    // Predicated region
    $region34: #{tpu_custom_call.1} parent=1 // pred_check
      _
    $region35: #{tpu_custom_call.1} parent=1 // pred_check_branch
      %77 = sbr.rel (0) target = $region37
    $region36: #{tpu_custom_call.1} parent=1 // pred_region
      %79 = dma.done [#allocation6], 2048
    $region37: #{tpu_custom_call.1} parent=1 // pred_fallthru
      _
    // Predicated region
    $region38: #{tpu_custom_call.1} parent=1 // pred_check
      _
    $region39: #{tpu_custom_call.1} parent=1 // pred_check_branch
      %81 = sbr.rel (0) target = $region41
    $region40: #{tpu_custom_call.1} parent=1 // pred_region
      %83 = dma.done [#allocation6], 2048
    $region41: #{tpu_custom_call.1} parent=1 // pred_fallthru
      _
    // Predicated region
    $region42: #{tpu_custom_call.1} parent=1 // pred_check
      _
    $region43: #{tpu_custom_call.1} parent=1 // pred_check_branch
      %85 = sbr.rel (0) target = $region45
    $region44: #{tpu_custom_call.1} parent=1 // pred_region
      %87 = dma.done [#allocation9], 2048
    $region45: #{tpu_custom_call.1} parent=1 // pred_fallthru
      _
    %v88 = vld [vmem:[#allocation2] sm:$0xff]
    %v89 = vld [vmem:[#allocation5] sm:$0xff]
    %v90 = vld [vmem:[#allocation5 + $0x8] sm:$0xff]
    %v91 = vld [vmem:[#allocation5 + $0x10] sm:$0xff]
    %v92 = vld [vmem:[#allocation5 + $0x18] sm:$0xff]
    %v93 = vld [vmem:[#allocation5 + $0x20] sm:$0xff]
    %v94 = vld [vmem:[#allocation5 + $0x28] sm:$0xff]
    %v95 = vld [vmem:[#allocation5 + $0x30] sm:$0xff]
    %v96 = vld [vmem:[#allocation5 + $0x38] sm:$0xff]
    %v97 = vld [vmem:[#allocation5 + $0x40] sm:$0xff]
    %v98 = vld [vmem:[#allocation5 + $0x48] sm:$0xff]
    %v99 = vld [vmem:[#allocation5 + $0x50] sm:$0xff]
    %v100 = vld [vmem:[#allocation5 + $0x58] sm:$0xff]
    %v101 = vld [vmem:[#allocation5 + $0x60] sm:$0xff]
    %v102 = vld [vmem:[#allocation5 + $0x68] sm:$0xff]
    %v103 = vld [vmem:[#allocation5 + $0x70] sm:$0xff]
    %v104 = vld [vmem:[#allocation5 + $0x78] sm:$0xff]
    %v105 = vld [vmem:[%s2] sm:$0x1]
    %v107 = vperm.slane %v105, 0
    %109 = vmatpush.msra.mxu0 %v104
    %110 = vmatpush.msra.mxu0 %v103
    %111 = vmatpush.msra.mxu0 %v102
    %112 = vmatpush.msra.mxu0 %v101
    %113 = vmatpush.msra.mxu0 %v100
    %114 = vmatpush.msra.mxu0 %v99
    %115 = vmatpush.msra.mxu0 %v98
    %116 = vmatpush.msra.mxu0 %v97
    %117 = vmatpush.msra.mxu0 %v96
    %118 = vmatpush.msra.mxu0 %v95
    %119 = vmatpush.msra.mxu0 %v94
    %120 = vmatpush.msra.mxu0 %v93
    %121 = vmatpush.msra.mxu0 %v92
    %122 = vmatpush.msra.mxu0 %v91
    %123 = vmatpush.msra.mxu0 %v90
    %124 = vmatpush.msra.mxu0 %v89
    %125 = vmatmul.f32.gmra.mxu0 %v88
    %v126 = vpop.f32.mrf.mxu0
    %v127 = vadd.f32 %v107, %v126
    %128 = vdwg.mxu0
    %v129 = vmax.f32 %v127, 0.0
    %v130 = vld [vmem:[#allocation7] sm:$0xff]
    %v131 = vld [vmem:[#allocation7 + $0x8] sm:$0xff]
    %v132 = vld [vmem:[#allocation7 + $0x10] sm:$0xff]
    %v133 = vld [vmem:[#allocation7 + $0x18] sm:$0xff]
    %v134 = vld [vmem:[#allocation7 + $0x20] sm:$0xff]
    %v135 = vld [vmem:[#allocation7 + $0x28] sm:$0xff]
    %v136 = vld [vmem:[#allocation7 + $0x30] sm:$0xff]
    %v137 = vld [vmem:[#allocation7 + $0x38] sm:$0xff]
    %v138 = vld [vmem:[#allocation7 + $0x40] sm:$0xff]
    %v139 = vld [vmem:[#allocation7 + $0x48] sm:$0xff]
    %v140 = vld [vmem:[#allocation7 + $0x50] sm:$0xff]
    %v141 = vld [vmem:[#allocation7 + $0x58] sm:$0xff]
    %v142 = vld [vmem:[#allocation7 + $0x60] sm:$0xff]
    %v143 = vld [vmem:[#allocation7 + $0x68] sm:$0xff]
    %v144 = vld [vmem:[#allocation7 + $0x70] sm:$0xff]
    %v145 = vld [vmem:[#allocation7 + $0x78] sm:$0xff]
    %v146 = vld [vmem:[%s4] sm:$0x1]
    %v148 = vperm.slane %v146, 0
    %150 = vmatpush.msra.mxu0 %v145
    %151 = vmatpush.msra.mxu0 %v144
    %152 = vmatpush.msra.mxu0 %v143
    %153 = vmatpush.msra.mxu0 %v142
    %154 = vmatpush.msra.mxu0 %v141
    %155 = vmatpush.msra.mxu0 %v140
    %156 = vmatpush.msra.mxu0 %v139
    %157 = vmatpush.msra.mxu0 %v138
    %158 = vmatpush.msra.mxu0 %v137
    %159 = vmatpush.msra.mxu0 %v136
    %160 = vmatpush.msra.mxu0 %v135
    %161 = vmatpush.msra.mxu0 %v134
    %162 = vmatpush.msra.mxu0 %v133
    %163 = vmatpush.msra.mxu0 %v132
    %164 = vmatpush.msra.mxu0 %v131
    %165 = vmatpush.msra.mxu0 %v130
    %166 = vmatmul.f32.gmra.mxu0 %v129
    %v167 = vpop.f32.mrf.mxu0
    %v168 = vadd.f32 %v148, %v167
    %169 = vdwg.mxu0
    %v170 = vmax.f32 %v168, 0.0
    %v171 = vadd.f32 %v170, %v129
    %v172 = vld [vmem:[#allocation8] sm:$0xff]
    %v173 = vld [vmem:[#allocation8 + $0x8] sm:$0xff]
    %v174 = vld [vmem:[#allocation8 + $0x10] sm:$0xff]
    %v175 = vld [vmem:[#allocation8 + $0x18] sm:$0xff]
    %v176 = vld [vmem:[#allocation8 + $0x20] sm:$0xff]
    %v177 = vld [vmem:[#allocation8 + $0x28] sm:$0xff]
    %v178 = vld [vmem:[#allocation8 + $0x30] sm:$0xff]
    %v179 = vld [vmem:[#allocation8 + $0x38] sm:$0xff]
    %v180 = vld [vmem:[#allocation8 + $0x40] sm:$0xff]
    %v181 = vld [vmem:[#allocation8 + $0x48] sm:$0xff]
    %v182 = vld [vmem:[#allocation8 + $0x50] sm:$0xff]
    %v183 = vld [vmem:[#allocation8 + $0x58] sm:$0xff]
    %v184 = vld [vmem:[#allocation8 + $0x60] sm:$0xff]
    %v185 = vld [vmem:[#allocation8 + $0x68] sm:$0xff]
    %v186 = vld [vmem:[#allocation8 + $0x70] sm:$0xff]
    %v187 = vld [vmem:[#allocation8 + $0x78] sm:$0xff]
    %v188 = vld [vmem:[%s6] sm:$0x1]
    %v190 = vperm.slane %v188, 0
    %192 = vmatpush.msra.mxu0 %v187
    %193 = vmatpush.msra.mxu0 %v186
    %194 = vmatpush.msra.mxu0 %v185
    %195 = vmatpush.msra.mxu0 %v184
    %196 = vmatpush.msra.mxu0 %v183
    %197 = vmatpush.msra.mxu0 %v182
    %198 = vmatpush.msra.mxu0 %v181
    %199 = vmatpush.msra.mxu0 %v180
    %200 = vmatpush.msra.mxu0 %v179
    %201 = vmatpush.msra.mxu0 %v178
    %202 = vmatpush.msra.mxu0 %v177
    %203 = vmatpush.msra.mxu0 %v176
    %204 = vmatpush.msra.mxu0 %v175
    %205 = vmatpush.msra.mxu0 %v174
    %206 = vmatpush.msra.mxu0 %v173
    %207 = vmatpush.msra.mxu0 %v172
    %208 = vmatmul.f32.gmra.mxu0 %v171
    %v209 = vpop.f32.mrf.mxu0
    %v210 = vadd.f32 %v190, %v209
    %211 = vdwg.mxu0
    %212 = vst [vmem:[#allocation10] sm:$0xff] %v210
    // Predicated region
    $region46: #{tpu_custom_call.1} parent=1 // pred_check
      _
    $region47: #{tpu_custom_call.1} parent=1 // pred_check_branch
      %214 = sbr.rel (0) target = $region49
    $region48: #{tpu_custom_call.1} parent=1 // pred_region
      %216 = vsyncadd [#allocation4], 0
      %s218 = sshll.u32 [#allocation10], 4
      %s219 = int_to_ptr.vmem [resolvable:$true] %s218
      %s220 = sshll.u32 %s7, 4
      %s221 = int_to_ptr.hbm [resolvable:$true] %s220
      %223 = dma.vmem_to_hbm [thread:$0]  %s219, 128, %s221, [#allocation4]
    $region49: #{tpu_custom_call.1} parent=1 // pred_fallthru
      _
    // Predicated region
    $region50: #{tpu_custom_call.1} parent=1 // pred_check
      _
    $region51: #{tpu_custom_call.1} parent=1 // pred_check_branch
      %225 = sbr.rel (0) target = $region53
    $region52: #{tpu_custom_call.1} parent=1 // pred_region
      %227 = dma.done [#allocation4], 128
    $region53: #{tpu_custom_call.1} parent=1 // pred_fallthru
      _
    %228 = vsyncpa [#allocation3], 1
    %229 = vsyncpa [#allocation6], 1
    %230 = vsyncpa [#allocation9], 1
    %231 = vsyncpa [#allocation4], 1

// kernel: tpu_custom_call.1
$region0: #{tpu_custom_call.1}
  #allocation0 [shape = 'u32[]', space=smem, size = 0x4, offset = 0x4, fixed_abs, tag = 'smem constant byte address 0x4 - core index']
  #allocation1 [shape = 'u32[72,128]{1,0:T(1,128)}', space=vmem, size = 0x9000, scoped, tag = 'internal scratch']
  %s0 = inlined_call_operand.hbm [shape: f32[8,128], index: 0, kind: input, shape index: {}]
  %s1 = inlined_call_operand.hbm [shape: f32[128,128], index: 1, kind: input, shape index: {}]
  %s2 = inlined_call_operand.vmem [shape: f32[1,128], index: 2, kind: input, shape index: {}]
  %s3 = inlined_call_operand.hbm [shape: f32[128,128], index: 3, kind: input, shape index: {}]
  %s4 = inlined_call_operand.vmem [shape: f32[1,128], index: 4, kind: input, shape index: {}]
  %s5 = inlined_call_operand.hbm [shape: f32[128,128], index: 5, kind: input, shape index: {}]
  %s6 = inlined_call_operand.vmem [shape: f32[1,128], index: 6, kind: input, shape index: {}]
  %s7 = inlined_call_operand.hbm [shape: f32[8,128], index: 7, kind: output, shape index: {}]
  %s8 = sld [smem:[#allocation0]]
  $region54: #{tpu_custom_call.1} parent=0
    _
  %s10 = ssub.s32 1, %s8
  %s11 = scalar_select 0, %s10, %s8
  $region1: #{tpu_custom_call.1} parent=0
    #allocation2 [shape = 'u8[4096]{0}', space=vmem, size = 0x1000, scoped, tag = 'input window, operand 0, single buffered']
    #allocation3 [shape = 's32[1]{0}', space=sflag, size = 0x4, scoped, tag = 'scoped memory for tpu_custom_call.1']
    #allocation4 [shape = 's32[1]{0}', space=sflag, size = 0x4, scoped, tag = 'scoped memory for tpu_custom_call.1']
    #allocation5 [shape = 'u8[65536]{0}', space=vmem, size = 0x10000, scoped, tag = 'input window, operand 1, single buffered']
    #allocation6 [shape = 's32[1]{0}', space=sflag, size = 0x4, scoped, tag = 'scoped memory for tpu_custom_call.1']
    #allocation7 [shape = 'u8[65536]{0}', space=vmem, size = 0x10000, scoped, tag = 'input window, operand 3, single buffered']
    #allocation8 [shape = 'u8[65536]{0}', space=vmem, size = 0x10000, scoped, tag = 'input window, operand 5, single buffered']
    #allocation9 [shape = 's32[1]{0}', space=sflag, size = 0x4, scoped, tag = 'scoped memory for tpu_custom_call.1']
    #allocation10 [shape = 'u8[4096]{0}', space=vmem, size = 0x1000, scoped, tag = 'output window, operand 0, single buffered']
    %12 = vsyncpa [#allocation3], 0
    %13 = vsyncpa [#allocation6], 0
    %14 = vsyncpa [#allocation9], 0
    %15 = vsyncpa [#allocation4], 0
    // Predicated region
    $region2: #{tpu_custom_call.1} parent=1 // pred_check
      _
    $region3: #{tpu_custom_call.1} parent=1 // pred_check_branch
      %17 = sbr.rel (0) target = $region5
    $region4: #{tpu_custom_call.1} parent=1 // pred_region
      %19 = vsyncadd [#allocation3], 0
      %s21 = sshll.u32 %s0, 4
      %s22 = int_to_ptr.hbm [resolvable:$true] %s21
      %s23 = sshll.u32 [#allocation2], 4
      %s24 = int_to_ptr.vmem [resolvable:$true] %s23
      %26 = dma.hbm_to_vmem [thread:$0]  %s22, 128, %s24, [#allocation3]
    $region5: #{tpu_custom_call.1} parent=1 // pred_fallthru
      _
    // Predicated region
    $region6: #{tpu_custom_call.1} parent=1 // pred_check
      _
    $region7: #{tpu_custom_call.1} parent=1 // pred_check_branch
      %28 = sbr.rel (0) target = $region9
    $region8: #{tpu_custom_call.1} parent=1 // pred_region
      %30 = vsyncadd [#allocation6], 0
      %s31 = sshll.u32 %s1, 4
      %s32 = int_to_ptr.hbm [resolvable:$true] %s31
      %s33 = sshll.u32 [#allocation5], 4
      %s34 = int_to_ptr.vmem [resolvable:$true] %s33
      %39 = dma.hbm_to_vmem [thread:$0]  %s32, 2048, %s34, [#allocation6], 128, 128, 8
    $region9: #{tpu_custom_call.1} parent=1 // pred_fallthru
      _
    // Predicated region
    $region10: #{tpu_custom_call.1} parent=1 // pred_check
      _
    $region11: #{tpu_custom_call.1} parent=1 // pred_check_branch
      %41 = sbr.rel (0) target = $region13
    $region12: #{tpu_custom_call.1} parent=1 // pred_region
      _
    $region13: #{tpu_custom_call.1} parent=1 // pred_fallthru
      _
    // Predicated region
    $region14: #{tpu_custom_call.1} parent=1 // pred_check
      _
    $region15: #{tpu_custom_call.1} parent=1 // pred_check_branch
      %43 = sbr.rel (0) target = $region17
    $region16: #{tpu_custom_call.1} parent=1 // pred_region
      %45 = vsyncadd [#allocation6], 0
      %s46 = sshll.u32 %s3, 4
      %s47 = int_to_ptr.hbm [resolvable:$true] %s46
      %s48 = sshll.u32 [#allocation7], 4
      %s49 = int_to_ptr.vmem [resolvable:$true] %s48
      %54 = dma.hbm_to_vmem [thread:$0]  %s47, 2048, %s49, [#allocation6], 128, 128, 8
    $region17: #{tpu_custom_call.1} parent=1 // pred_fallthru
      _
    // Predicated region
    $region18: #{tpu_custom_call.1} parent=1 // pred_check
      _
    $region19: #{tpu_custom_call.1} parent=1 // pred_check_branch
      %56 = sbr.rel (0) target = $region21
    $region20: #{tpu_custom_call.1} parent=1 // pred_region
      _
    $region21: #{tpu_custom_call.1} parent=1 // pred_fallthru
      _
    // Predicated region
    $region22: #{tpu_custom_call.1} parent=1 // pred_check
      _
    $region23: #{tpu_custom_call.1} parent=1 // pred_check_branch
      %58 = sbr.rel (0) target = $region25
    $region24: #{tpu_custom_call.1} parent=1 // pred_region
      %60 = vsyncadd [#allocation9], 0
      %s61 = sshll.u32 %s5, 4
      %s62 = int_to_ptr.hbm [resolvable:$true] %s61
      %s63 = sshll.u32 [#allocation8], 4
      %s64 = int_to_ptr.vmem [resolvable:$true] %s63
      %69 = dma.hbm_to_vmem [thread:$0]  %s62, 2048, %s64, [#allocation9], 128, 128, 8
    $region25: #{tpu_custom_call.1} parent=1 // pred_fallthru
      _
    // Predicated region
    $region26: #{tpu_custom_call.1} parent=1 // pred_check
      _
    $region27: #{tpu_custom_call.1} parent=1 // pred_check_branch
      %71 = sbr.rel (0) target = $region29
    $region28: #{tpu_custom_call.1} parent=1 // pred_region
      _
    $region29: #{tpu_custom_call.1} parent=1 // pred_fallthru
      _
    // Predicated region
    $region30: #{tpu_custom_call.1} parent=1 // pred_check
      _
    $region31: #{tpu_custom_call.1} parent=1 // pred_check_branch
      %73 = sbr.rel (0) target = $region33
    $region32: #{tpu_custom_call.1} parent=1 // pred_region
      %75 = dma.done [#allocation3], 128
    $region33: #{tpu_custom_call.1} parent=1 // pred_fallthru
      _
    // Predicated region
    $region34: #{tpu_custom_call.1} parent=1 // pred_check
      _
    $region35: #{tpu_custom_call.1} parent=1 // pred_check_branch
      %77 = sbr.rel (0) target = $region37
    $region36: #{tpu_custom_call.1} parent=1 // pred_region
      %79 = dma.done [#allocation6], 2048
    $region37: #{tpu_custom_call.1} parent=1 // pred_fallthru
      _
    // Predicated region
    $region38: #{tpu_custom_call.1} parent=1 // pred_check
      _
    $region39: #{tpu_custom_call.1} parent=1 // pred_check_branch
      %81 = sbr.rel (0) target = $region41
    $region40: #{tpu_custom_call.1} parent=1 // pred_region
      %83 = dma.done [#allocation6], 2048
    $region41: #{tpu_custom_call.1} parent=1 // pred_fallthru
      _
    // Predicated region
    $region42: #{tpu_custom_call.1} parent=1 // pred_check
      _
    $region43: #{tpu_custom_call.1} parent=1 // pred_check_branch
      %85 = sbr.rel (0) target = $region45
    $region44: #{tpu_custom_call.1} parent=1 // pred_region
      %87 = dma.done [#allocation9], 2048
    $region45: #{tpu_custom_call.1} parent=1 // pred_fallthru
      _
    %v88 = vld [vmem:[#allocation2] sm:$0xff]
    %v89 = vld [vmem:[#allocation5] sm:$0xff]
    %v90 = vld [vmem:[#allocation5 + $0x8] sm:$0xff]
    %v91 = vld [vmem:[#allocation5 + $0x10] sm:$0xff]
    %v92 = vld [vmem:[#allocation5 + $0x18] sm:$0xff]
    %v93 = vld [vmem:[#allocation5 + $0x20] sm:$0xff]
    %v94 = vld [vmem:[#allocation5 + $0x28] sm:$0xff]
    %v95 = vld [vmem:[#allocation5 + $0x30] sm:$0xff]
    %v96 = vld [vmem:[#allocation5 + $0x38] sm:$0xff]
    %v97 = vld [vmem:[#allocation5 + $0x40] sm:$0xff]
    %v98 = vld [vmem:[#allocation5 + $0x48] sm:$0xff]
    %v99 = vld [vmem:[#allocation5 + $0x50] sm:$0xff]
    %v100 = vld [vmem:[#allocation5 + $0x58] sm:$0xff]
    %v101 = vld [vmem:[#allocation5 + $0x60] sm:$0xff]
    %v102 = vld [vmem:[#allocation5 + $0x68] sm:$0xff]
    %v103 = vld [vmem:[#allocation5 + $0x70] sm:$0xff]
    %v104 = vld [vmem:[#allocation5 + $0x78] sm:$0xff]
    %v105 = vld [vmem:[%s2] sm:$0x1]
    %v107 = vperm.slane %v105, 0
    %109 = vmatpush.msra.mxu0 %v104
    %110 = vmatpush.msra.mxu0 %v103
    %111 = vmatpush.msra.mxu0 %v102
    %112 = vmatpush.msra.mxu0 %v101
    %113 = vmatpush.msra.mxu0 %v100
    %114 = vmatpush.msra.mxu0 %v99
    %115 = vmatpush.msra.mxu0 %v98
    %116 = vmatpush.msra.mxu0 %v97
    %117 = vmatpush.msra.mxu0 %v96
    %118 = vmatpush.msra.mxu0 %v95
    %119 = vmatpush.msra.mxu0 %v94
    %120 = vmatpush.msra.mxu0 %v93
    %121 = vmatpush.msra.mxu0 %v92
    %122 = vmatpush.msra.mxu0 %v91
    %123 = vmatpush.msra.mxu0 %v90
    %124 = vmatpush.msra.mxu0 %v89
    %125 = vmatmul.f32.gmra.mxu0 %v88
    %v126 = vpop.f32.mrf.mxu0
    %v127 = vadd.f32 %v107, %v126
    %128 = vdwg.mxu0
    %v129 = vmax.f32 %v127, 0.0
    %v130 = vld [vmem:[#allocation7] sm:$0xff]
    %v131 = vld [vmem:[#allocation7 + $0x8] sm:$0xff]
    %v132 = vld [vmem:[#allocation7 + $0x10] sm:$0xff]
    %v133 = vld [vmem:[#allocation7 + $0x18] sm:$0xff]
    %v134 = vld [vmem:[#allocation7 + $0x20] sm:$0xff]
    %v135 = vld [vmem:[#allocation7 + $0x28] sm:$0xff]
    %v136 = vld [vmem:[#allocation7 + $0x30] sm:$0xff]
    %v137 = vld [vmem:[#allocation7 + $0x38] sm:$0xff]
    %v138 = vld [vmem:[#allocation7 + $0x40] sm:$0xff]
    %v139 = vld [vmem:[#allocation7 + $0x48] sm:$0xff]
    %v140 = vld [vmem:[#allocation7 + $0x50] sm:$0xff]
    %v141 = vld [vmem:[#allocation7 + $0x58] sm:$0xff]
    %v142 = vld [vmem:[#allocation7 + $0x60] sm:$0xff]
    %v143 = vld [vmem:[#allocation7 + $0x68] sm:$0xff]
    %v144 = vld [vmem:[#allocation7 + $0x70] sm:$0xff]
    %v145 = vld [vmem:[#allocation7 + $0x78] sm:$0xff]
    %v146 = vld [vmem:[%s4] sm:$0x1]
    %v148 = vperm.slane %v146, 0
    %150 = vmatpush.msra.mxu0 %v145
    %151 = vmatpush.msra.mxu0 %v144
    %152 = vmatpush.msra.mxu0 %v143
    %153 = vmatpush.msra.mxu0 %v142
    %154 = vmatpush.msra.mxu0 %v141
    %155 = vmatpush.msra.mxu0 %v140
    %156 = vmatpush.msra.mxu0 %v139
    %157 = vmatpush.msra.mxu0 %v138
    %158 = vmatpush.msra.mxu0 %v137
    %159 = vmatpush.msra.mxu0 %v136
    %160 = vmatpush.msra.mxu0 %v135
    %161 = vmatpush.msra.mxu0 %v134
    %162 = vmatpush.msra.mxu0 %v133
    %163 = vmatpush.msra.mxu0 %v132
    %164 = vmatpush.msra.mxu0 %v131
    %165 = vmatpush.msra.mxu0 %v130
    %166 = vmatmul.f32.gmra.mxu0 %v129
    %v167 = vpop.f32.mrf.mxu0
    %v168 = vadd.f32 %v148, %v167
    %169 = vdwg.mxu0
    %v170 = vmax.f32 %v168, 0.0
    %v171 = vadd.f32 %v170, %v129
    %v172 = vld [vmem:[#allocation8] sm:$0xff]
    %v173 = vld [vmem:[#allocation8 + $0x8] sm:$0xff]
    %v174 = vld [vmem:[#allocation8 + $0x10] sm:$0xff]
    %v175 = vld [vmem:[#allocation8 + $0x18] sm:$0xff]
    %v176 = vld [vmem:[#allocation8 + $0x20] sm:$0xff]
    %v177 = vld [vmem:[#allocation8 + $0x28] sm:$0xff]
    %v178 = vld [vmem:[#allocation8 + $0x30] sm:$0xff]
    %v179 = vld [vmem:[#allocation8 + $0x38] sm:$0xff]
    %v180 = vld [vmem:[#allocation8 + $0x40] sm:$0xff]
    %v181 = vld [vmem:[#allocation8 + $0x48] sm:$0xff]
    %v182 = vld [vmem:[#allocation8 + $0x50] sm:$0xff]
    %v183 = vld [vmem:[#allocation8 + $0x58] sm:$0xff]
    %v184 = vld [vmem:[#allocation8 + $0x60] sm:$0xff]
    %v185 = vld [vmem:[#allocation8 + $0x68] sm:$0xff]
    %v186 = vld [vmem:[#allocation8 + $0x70] sm:$0xff]
    %v187 = vld [vmem:[#allocation8 + $0x78] sm:$0xff]
    %v188 = vld [vmem:[%s6] sm:$0x1]
    %v190 = vperm.slane %v188, 0
    %192 = vmatpush.msra.mxu0 %v187
    %193 = vmatpush.msra.mxu0 %v186
    %194 = vmatpush.msra.mxu0 %v185
    %195 = vmatpush.msra.mxu0 %v184
    %196 = vmatpush.msra.mxu0 %v183
    %197 = vmatpush.msra.mxu0 %v182
    %198 = vmatpush.msra.mxu0 %v181
    %199 = vmatpush.msra.mxu0 %v180
    %200 = vmatpush.msra.mxu0 %v179
    %201 = vmatpush.msra.mxu0 %v178
    %202 = vmatpush.msra.mxu0 %v177
    %203 = vmatpush.msra.mxu0 %v176
    %204 = vmatpush.msra.mxu0 %v175
    %205 = vmatpush.msra.mxu0 %v174
    %206 = vmatpush.msra.mxu0 %v173
    %207 = vmatpush.msra.mxu0 %v172
    %208 = vmatmul.f32.gmra.mxu0 %v171
    %v209 = vpop.f32.mrf.mxu0
    %v210 = vadd.f32 %v190, %v209
    %211 = vdwg.mxu0
    %212 = vst [vmem:[#allocation10] sm:$0xff] %v210
    // Predicated region
    $region46: #{tpu_custom_call.1} parent=1 // pred_check
      _
    $region47: #{tpu_custom_call.1} parent=1 // pred_check_branch
      %214 = sbr.rel (0) target = $region49
    $region48: #{tpu_custom_call.1} parent=1 // pred_region
      %216 = vsyncadd [#allocation4], 0
      %s218 = sshll.u32 [#allocation10], 4
      %s219 = int_to_ptr.vmem [resolvable:$true] %s218
      %s220 = sshll.u32 %s7, 4
      %s221 = int_to_ptr.hbm [resolvable:$true] %s220
      %223 = dma.vmem_to_hbm [thread:$0]  %s219, 128, %s221, [#allocation4]
    $region49: #{tpu_custom_call.1} parent=1 // pred_fallthru
      _
    // Predicated region
    $region50: #{tpu_custom_call.1} parent=1 // pred_check
      _
    $region51: #{tpu_custom_call.1} parent=1 // pred_check_branch
      %225 = sbr.rel (0) target = $region53
    $region52: #{tpu_custom_call.1} parent=1 // pred_region
      %227 = dma.done [#allocation4], 128
    $region53: #{tpu_custom_call.1} parent=1 // pred_fallthru
      _
    %228 = vsyncpa [#allocation3], 1
    %229 = vsyncpa [#allocation6], 1
    %230 = vsyncpa [#allocation9], 1
    %231 = vsyncpa [#allocation4], 1

</llo_original>
